<compile_context>
chip_gen: v7x
topology: tpu7x:2x2x1
jax: 0.10.0
libtpu: 0.0.40
codegen_flags: <defaults>
</compile_context>

<pallas_src>
import jax
import jax.numpy as jnp
from jax import lax
from jax.experimental import pallas as pl
from jax.experimental.pallas import tpu as pltpu


def _round_up(x, m):
    return (x + m - 1) // m * m


def _linear_kernel(x_ref, w_ref, o_ref):
    # x_ref: (TM, K) activation tile, w_ref: (N, K) resident weight.
    # Contract on K (dim 1 of both) -> (TM, N); f32 accumulation on the MXU.
    o_ref[...] = lax.dot_general(
        x_ref[...],
        w_ref[...],
        dimension_numbers=(((1,), (1,)), ((), ())),
        preferred_element_type=jnp.float32,
    ).astype(o_ref.dtype)


def embedding_layer_forward(x, weight, *, tm_max=512,
                            vmem_budget_bytes=12 * 1024 * 1024):
    """y = x @ weight.T  (nn.Linear(input_size, embed_size, bias=False)).

    x:      (..., input_size)                     -- e.g. (batch, seq, K)
    weight: (embed_size, input_size) = (N, K)     -- PyTorch nn.Linear layout
    returns (..., embed_size), dtype == x.dtype
    """
    *lead, k = x.shape
    n, k_w = weight.shape
    assert k == k_w, f"feature dim mismatch: {k} vs {k_w}"

    m = 1
    for d in lead:
        m *= d
    x2d = x.reshape(m, k)

    # ---- choose the M tile against a conservative VMEM budget --------------
    # 2*TM*K (double-buffered x) + 2*N*K (W, allow 2 bufs) + 2*TM*N (out).
    xb = jnp.dtype(x.dtype).itemsize
    wb = jnp.dtype(weight.dtype).itemsize
    ob = xb
    w_bytes = 2 * n * k * wb
    per_row = 2 * k * xb + 2 * n * ob
    avail = max(vmem_budget_bytes - w_bytes, 8 * per_row)
    tm_fit = max(8, (avail // per_row) // 8 * 8)
    tm = int(min(tm_max, _round_up(m, 8), tm_fit))
    tm = max(8, tm - tm % 8)

    # Pad M so the grid tiles exactly (padded rows are zeros; sliced off after).
    m_pad = _round_up(m, tm)
    if m_pad != m:
        x2d = jnp.pad(x2d, ((0, m_pad - m), (0, 0)))

    grid = (pl.cdiv(m_pad, tm),)

    cost = pl.CostEstimate(
        flops=2 * m * n * k,
        transcendentals=0,
        bytes_accessed=m * k * xb + n * k * wb + m * n * ob,
    )

    out = pl.pallas_call(
        _linear_kernel,
        out_shape=jax.ShapeDtypeStruct((m_pad, n), x.dtype),
        grid=grid,
        in_specs=[
            pl.BlockSpec((tm, k), lambda i: (i, 0)),   # activation tile (pipelined)
            pl.BlockSpec((n, k), lambda i: (0, 0)),    # weight, resident across grid
        ],
        out_specs=pl.BlockSpec((tm, n), lambda i: (i, 0)),
        compiler_params=pltpu.CompilerParams(
            dimension_semantics=("parallel",),         # row tiles independent
        ),
        cost_estimate=cost,
    )(x2d, weight)

    if m_pad != m:
        out = out[:m]
    return out.reshape(*lead, n)


if __name__ == "__main__":
    # Shapes consistent with the module: x (batch, seq, input_size),
    # embed_size = 256 (as in the spec).  K=128 / N=256 keep lanes dense.
    batch, seq, input_size, embed_size = 2, 8, 128, 256

    key = jax.random.PRNGKey(0)
    kx, kw = jax.random.split(key)

    # bf16 operands end-to-end (MXU-native), f32 accumulation in the kernel.
    x = jax.random.normal(kx, (batch, seq, input_size), dtype=jnp.float32)
    bound = 1.0 / jnp.sqrt(jnp.float32(input_size))
    weight = jax.random.uniform(
        kw, (embed_size, input_size), dtype=jnp.float32,
        minval=-bound, maxval=bound,
    )
    x = x.astype(jnp.bfloat16)
    weight = weight.astype(jnp.bfloat16)

    y = embedding_layer_forward(x, weight)
    y = jax.block_until_ready(y)

    # Reference: same math as PyTorch nn.Linear(bias=False), f32 accumulate.
    y_ref = (x.astype(jnp.float32) @ weight.astype(jnp.float32).T).astype(x.dtype)
    assert y.shape == (batch, seq, embed_size)
    assert jnp.allclose(y.astype(jnp.float32), y_ref.astype(jnp.float32),
                        atol=1e-2, rtol=1e-2)

    print("KERNEL_OK")
</pallas_src>

<mosaic_0001>
module attributes {stable_mosaic.version = 11 : i64} {
  func.func @_linear_kernel(%arg0: i32, %arg1: memref<16x128xbf16, #tpu.memory_space<vmem>>, %arg2: memref<256x128xbf16, #tpu.memory_space<vmem>>, %arg3: memref<16x256xbf16, #tpu.memory_space<vmem>>) attributes {dimension_semantics = [#tpu.dimension_semantics<parallel>], iteration_bounds = array<i64: 1>, scalar_prefetch = 0 : i64, scratch_operands = 0 : i64, tpu.core_type = #tpu.core_type<tc>, window_params = [{transform_indices = @transform_0, window_bounds = array<i64: 16, 128>}, {pipeline_mode = #tpu.pipeline_mode<synchronous>, transform_indices = @transform_1, window_bounds = array<i64: 256, 128>}, {transform_indices = @transform_2, window_bounds = array<i64: 16, 256>}]} {
    %c0 = arith.constant 0 : index
    %c0_0 = arith.constant 0 : index
    %0 = vector.load %arg1[%c0, %c0_0] : memref<16x128xbf16, #tpu.memory_space<vmem>>, vector<16x128xbf16>
    %c0_1 = arith.constant 0 : index
    %c0_2 = arith.constant 0 : index
    %1 = vector.load %arg2[%c0_1, %c0_2] : memref<256x128xbf16, #tpu.memory_space<vmem>>, vector<256x128xbf16>
    %cst = arith.constant dense<0.000000e+00> : vector<16x256xf32>
    %2 = tpu.matmul %0, %1, %cst {dimension_numbers = #tpu.dot_dimension_numbers<[1], [1], [0], [0], [0, 0, 1, 0], [], []>} : vector<16x128xbf16>, vector<256x128xbf16>, vector<16x256xf32> -> vector<16x256xf32>
    %3 = arith.truncf %2 : vector<16x256xf32> to vector<16x256xbf16>
    %c0_3 = arith.constant 0 : index
    %c0_4 = arith.constant 0 : index
    %4 = vector.load %arg3[%c0_3, %c0_4] : memref<16x256xbf16, #tpu.memory_space<vmem>>, vector<16x256xbf16>
    tpu.vector_store %arg3[%c0_3, %c0_4], %3 {strides = array<i32>} : memref<16x256xbf16, #tpu.memory_space<vmem>>, vector<16x256xbf16>,
    return
  }
  func.func @transform_0(%arg0: i32) -> (i32, i32) {
    %c0_i32 = arith.constant 0 : i32
    %c0_i32_0 = arith.constant 0 : i32
    return %arg0, %c0_i32 : i32, i32
  }
  func.func @transform_1(%arg0: i32) -> (i32, i32) {
    %c0_i32 = arith.constant 0 : i32
    %c0_i32_0 = arith.constant 0 : i32
    %c0_i32_1 = arith.constant 0 : i32
    return %c0_i32, %c0_i32_0 : i32, i32
  }
  func.func @transform_2(%arg0: i32) -> (i32, i32) {
    %c0_i32 = arith.constant 0 : i32
    %c0_i32_0 = arith.constant 0 : i32
    return %arg0, %c0_i32 : i32, i32
  }
}

</mosaic_0001>

<llo_original>
// kernel: tpu_custom_call.1
$region0: #{tpu_custom_call.1}
  #allocation0 [shape = 'u32[]', space=smem, size = 0x4, offset = 0x4, fixed_abs, tag = 'smem constant byte address 0x4 - core index']
  #allocation1 [shape = 'u32[144,128]{1,0:T(1,128)}', space=vmem, size = 0x12000, scoped, tag = 'internal scratch']
  %s0 = inlined_call_operand.hbm [shape: bf16[16,128], index: 0, kind: input, shape index: {}]
  %s1 = inlined_call_operand.hbm [shape: bf16[256,128], index: 1, kind: input, shape index: {}]
  %s2 = inlined_call_operand.hbm [shape: bf16[16,256], index: 2, kind: output, shape index: {}]
  %s3 = sld [smem:[#allocation0]]
  $region26: #{tpu_custom_call.1} parent=0
    _
  %s5 = ssub.s32 1, %s3
  %s6 = scalar_select 0, %s5, %s3
  $region1: #{tpu_custom_call.1} parent=0
    #allocation2 [shape = 'u8[4096]{0}', space=vmem, size = 0x1000, scoped, tag = 'input window, operand 0, single buffered']
    #allocation3 [shape = 's32[1]{0}', space=sflag, size = 0x4, scoped, tag = 'scoped memory for tpu_custom_call.1']
    #allocation4 [shape = 's32[1]{0}', space=sflag, size = 0x4, scoped, tag = 'scoped memory for tpu_custom_call.1']
    #allocation5 [shape = 'u8[65536]{0}', space=vmem, size = 0x10000, scoped, tag = 'input window, operand 1, single buffered']
    #allocation6 [shape = 's32[1]{0}', space=sflag, size = 0x4, scoped, tag = 'scoped memory for tpu_custom_call.1']
    #allocation7 [shape = 'u8[8192]{0}', space=vmem, size = 0x2000, scoped, tag = 'output window, operand 0, single buffered']
    %7 = vsyncpa [#allocation3], 0
    %8 = vsyncpa [#allocation6], 0
    %9 = vsyncpa [#allocation4], 0
    // Predicated region
    $region2: #{tpu_custom_call.1} parent=1 // pred_check
      _
    $region3: #{tpu_custom_call.1} parent=1 // pred_check_branch
      %11 = sbr.rel (0) target = $region5
    $region4: #{tpu_custom_call.1} parent=1 // pred_region
      %s13 = ssub.s32 128, 128
      %14 = vsyncadd [#allocation3], %s13
      %s15 = sshll.u32 [#allocation2], 4
      %s16 = int_to_ptr.vmem [resolvable:$true] %s15
      %21 = dma.hbm_to_vmem [thread:$0]  %s0, 128, %s16, [#allocation3], 64, 64, 4
    $region5: #{tpu_custom_call.1} parent=1 // pred_fallthru
      _
    // Predicated region
    $region6: #{tpu_custom_call.1} parent=1 // pred_check
      _
    $region7: #{tpu_custom_call.1} parent=1 // pred_check_branch
      %23 = sbr.rel (0) target = $region9
    $region8: #{tpu_custom_call.1} parent=1 // pred_region
      %s25 = ssub.s32 2048, 2048
      %26 = vsyncadd [#allocation6], %s25
      %s27 = sshll.u32 [#allocation5], 4
      %s28 = int_to_ptr.vmem [resolvable:$true] %s27
      %33 = dma.hbm_to_vmem [thread:$0]  %s1, 2048, %s28, [#allocation6], 64, 64, 4
    $region9: #{tpu_custom_call.1} parent=1 // pred_fallthru
      _
    // Predicated region
    $region10: #{tpu_custom_call.1} parent=1 // pred_check
      _
    $region11: #{tpu_custom_call.1} parent=1 // pred_check_branch
      %35 = sbr.rel (0) target = $region13
    $region12: #{tpu_custom_call.1} parent=1 // pred_region
      %36 = dma.done [#allocation3], 128
    $region13: #{tpu_custom_call.1} parent=1 // pred_fallthru
      _
    // Predicated region
    $region14: #{tpu_custom_call.1} parent=1 // pred_check
      _
    $region15: #{tpu_custom_call.1} parent=1 // pred_check_branch
      %38 = sbr.rel (0) target = $region17
    $region16: #{tpu_custom_call.1} parent=1 // pred_region
      %39 = dma.done [#allocation6], 2048
    $region17: #{tpu_custom_call.1} parent=1 // pred_fallthru
      _
    %v41 = vld [vmem:[#allocation2] sm:$0xf]
    %v42 = vld [vmem:[#allocation2 + $0x4] sm:$0xf]
    %v43 = vld [vmem:[#allocation5] sm:$0xf]
    %v44 = vld [vmem:[#allocation5 + $0x4] sm:$0xf]
    %v45 = vld [vmem:[#allocation5 + $0x8] sm:$0xf]
    %v46 = vld [vmem:[#allocation5 + $0xc] sm:$0xf]
    %v47 = vld [vmem:[#allocation5 + $0x10] sm:$0xf]
    %v48 = vld [vmem:[#allocation5 + $0x14] sm:$0xf]
    %v49 = vld [vmem:[#allocation5 + $0x18] sm:$0xf]
    %v50 = vld [vmem:[#allocation5 + $0x1c] sm:$0xf]
    %v51 = vld [vmem:[#allocation5 + $0x20] sm:$0xf]
    %v52 = vld [vmem:[#allocation5 + $0x24] sm:$0xf]
    %v53 = vld [vmem:[#allocation5 + $0x28] sm:$0xf]
    %v54 = vld [vmem:[#allocation5 + $0x2c] sm:$0xf]
    %v55 = vld [vmem:[#allocation5 + $0x30] sm:$0xf]
    %v56 = vld [vmem:[#allocation5 + $0x34] sm:$0xf]
    %v57 = vld [vmem:[#allocation5 + $0x38] sm:$0xf]
    %v58 = vld [vmem:[#allocation5 + $0x3c] sm:$0xf]
    %v59 = vld [vmem:[#allocation5 + $0x40] sm:$0xf]
    %v60 = vld [vmem:[#allocation5 + $0x44] sm:$0xf]
    %v61 = vld [vmem:[#allocation5 + $0x48] sm:$0xf]
    %v62 = vld [vmem:[#allocation5 + $0x4c] sm:$0xf]
    %v63 = vld [vmem:[#allocation5 + $0x50] sm:$0xf]
    %v64 = vld [vmem:[#allocation5 + $0x54] sm:$0xf]
    %v65 = vld [vmem:[#allocation5 + $0x58] sm:$0xf]
    %v66 = vld [vmem:[#allocation5 + $0x5c] sm:$0xf]
    %v67 = vld [vmem:[#allocation5 + $0x60] sm:$0xf]
    %v68 = vld [vmem:[#allocation5 + $0x64] sm:$0xf]
    %v69 = vld [vmem:[#allocation5 + $0x68] sm:$0xf]
    %v70 = vld [vmem:[#allocation5 + $0x6c] sm:$0xf]
    %v71 = vld [vmem:[#allocation5 + $0x70] sm:$0xf]
    %v72 = vld [vmem:[#allocation5 + $0x74] sm:$0xf]
    %v73 = vld [vmem:[#allocation5 + $0x78] sm:$0xf]
    %v74 = vld [vmem:[#allocation5 + $0x7c] sm:$0xf]
    %v77 = vunpack.c.l.b16 %v41
    %v78 = vunpack.c.l.b16 %v42
    %v79 = vpack.c.b16 %v78, %v77
    %v113 = vunpack.c.l.b16 %v43
    %v114 = vunpack.c.l.b16 %v44
    %v115 = vunpack.c.l.b16 %v45
    %v116 = vunpack.c.l.b16 %v46
    %v117 = vunpack.c.l.b16 %v47
    %v118 = vunpack.c.l.b16 %v48
    %v119 = vunpack.c.l.b16 %v49
    %v120 = vunpack.c.l.b16 %v50
    %v121 = vunpack.c.l.b16 %v51
    %v122 = vunpack.c.l.b16 %v52
    %v123 = vunpack.c.l.b16 %v53
    %v124 = vunpack.c.l.b16 %v54
    %v125 = vunpack.c.l.b16 %v55
    %v126 = vunpack.c.l.b16 %v56
    %v127 = vunpack.c.l.b16 %v57
    %v128 = vunpack.c.l.b16 %v58
    %v129 = vunpack.c.l.b16 %v59
    %v130 = vunpack.c.l.b16 %v60
    %v131 = vunpack.c.l.b16 %v61
    %v132 = vunpack.c.l.b16 %v62
    %v133 = vunpack.c.l.b16 %v63
    %v134 = vunpack.c.l.b16 %v64
    %v135 = vunpack.c.l.b16 %v65
    %v136 = vunpack.c.l.b16 %v66
    %v137 = vunpack.c.l.b16 %v67
    %v138 = vunpack.c.l.b16 %v68
    %v139 = vunpack.c.l.b16 %v69
    %v140 = vunpack.c.l.b16 %v70
    %v141 = vunpack.c.l.b16 %v71
    %v142 = vunpack.c.l.b16 %v72
    %v143 = vunpack.c.l.b16 %v73
    %v144 = vunpack.c.l.b16 %v74
    %v145 = vpack.c.b16 %v114, %v113
    %v146 = vpack.c.b16 %v116, %v115
    %v147 = vpack.c.b16 %v118, %v117
    %v148 = vpack.c.b16 %v120, %v119
    %v149 = vpack.c.b16 %v122, %v121
    %v150 = vpack.c.b16 %v124, %v123
    %v151 = vpack.c.b16 %v126, %v125
    %v152 = vpack.c.b16 %v128, %v127
    %v153 = vpack.c.b16 %v130, %v129
    %v154 = vpack.c.b16 %v132, %v131
    %v155 = vpack.c.b16 %v134, %v133
    %v156 = vpack.c.b16 %v136, %v135
    %v157 = vpack.c.b16 %v138, %v137
    %v158 = vpack.c.b16 %v140, %v139
    %v159 = vpack.c.b16 %v142, %v141
    %v160 = vpack.c.b16 %v144, %v143
    %177 = vmatprep.subr.bf16.mxu0 0
    %178 = vmatpush1.bf16.xpose.msra.mxu0 %v145
    %179 = vmatprep.subr.bf16.mxu0 0
    %180 = vmatpush1.bf16.xpose.msra.mxu0 %v146
    %181 = vmatprep.subr.bf16.mxu0 0
    %182 = vmatpush1.bf16.xpose.msra.mxu0 %v147
    %183 = vmatprep.subr.bf16.mxu0 0
    %184 = vmatpush1.bf16.xpose.msra.mxu0 %v148
    %185 = vmatprep.subr.bf16.mxu0 0
    %186 = vmatpush1.bf16.xpose.msra.mxu0 %v149
    %187 = vmatprep.subr.bf16.mxu0 0
    %188 = vmatpush1.bf16.xpose.msra.mxu0 %v150
    %189 = vmatprep.subr.bf16.mxu0 0
    %190 = vmatpush1.bf16.xpose.msra.mxu0 %v151
    %191 = vmatprep.subr.bf16.mxu0 0
    %192 = vmatpush1.bf16.xpose.msra.mxu0 %v152
    %193 = vmatprep.subr.bf16.mxu0 0
    %194 = vmatpush1.bf16.xpose.msra.mxu0 %v153
    %195 = vmatprep.subr.bf16.mxu0 0
    %196 = vmatpush1.bf16.xpose.msra.mxu0 %v154
    %197 = vmatprep.subr.bf16.mxu0 0
    %198 = vmatpush1.bf16.xpose.msra.mxu0 %v155
    %199 = vmatprep.subr.bf16.mxu0 0
    %200 = vmatpush1.bf16.xpose.msra.mxu0 %v156
    %201 = vmatprep.subr.bf16.mxu0 0
    %202 = vmatpush1.bf16.xpose.msra.mxu0 %v157
    %203 = vmatprep.subr.bf16.mxu0 0
    %204 = vmatpush1.bf16.xpose.msra.mxu0 %v158
    %205 = vmatprep.subr.bf16.mxu0 0
    %206 = vmatpush1.bf16.xpose.msra.mxu0 %v159
    %207 = vmatprep.subr.bf16.mxu0 0
    %208 = vmatpush1.bf16.xpose.msra.mxu0 %v160
    %209 = vmatprep.mubr.bf16.mxu0 0
    %210 = vmatmul.mubr.bf16.gmra.mrb[0].mxu0 %v79
    %v211 = vpop.f32.mrb[0].mxu0
    %v212 = vadd.f32 0.0, %v211
    %v213 = vpop.f32.mrb[0].mxu0
    %v214 = vadd.f32 0.0, %v213
    %v215 = vpop.f32.mrb[0].mxu0
    %v216 = vadd.f32 0.0, %v215
    %v217 = vpop.f32.mrb[0].mxu0
    %v218 = vadd.f32 0.0, %v217
    %219 = vdwg.mxu0
    %v220 = vpack.c.bf16 %v216, %v212
    %v221 = vpack.c.bf16 %v218, %v214
    %v224 = vunpack.c.l.b16 %v220
    %v225 = vunpack.c.l.b16 %v221
    %v226 = vunpack.c.h.b16 %v220
    %v227 = vunpack.c.h.b16 %v221
    %v228 = vpack.c.b16 %v225, %v224
    %v229 = vpack.c.b16 %v227, %v226
    %232 = vst [vmem:[#allocation7] sm:$0xff] %v228
    %233 = vst [vmem:[#allocation7 + $0x8] sm:$0xff] %v229
    // Predicated region
    $region18: #{tpu_custom_call.1} parent=1 // pred_check
      _
    $region19: #{tpu_custom_call.1} parent=1 // pred_check_branch
      %235 = sbr.rel (0) target = $region21
    $region20: #{tpu_custom_call.1} parent=1 // pred_region
      %s237 = ssub.s32 256, 256
      %238 = vsyncadd [#allocation4], %s237
      %s239 = sshll.u32 [#allocation7], 4
      %s240 = int_to_ptr.vmem [resolvable:$true] %s239
      %245 = dma.vmem_to_hbm [thread:$0]  %s240, 256, %s2, [#allocation4], 128, 128, 8
    $region21: #{tpu_custom_call.1} parent=1 // pred_fallthru
      _
    // Predicated region
    $region22: #{tpu_custom_call.1} parent=1 // pred_check
      _
    $region23: #{tpu_custom_call.1} parent=1 // pred_check_branch
      %247 = sbr.rel (0) target = $region25
    $region24: #{tpu_custom_call.1} parent=1 // pred_region
      %248 = dma.done [#allocation4], 256
    $region25: #{tpu_custom_call.1} parent=1 // pred_fallthru
      _
    %249 = vsyncpa [#allocation3], 1
    %250 = vsyncpa [#allocation6], 1
    %251 = vsyncpa [#allocation4], 1

</llo_original>
